<compile_context>
chip_gen: v5e
topology: v5e:2x2
jax: 0.10.0
libtpu: 0.0.40
codegen_flags: <defaults>
</compile_context>

<pallas_src>
import functools
import math

import jax
import jax.numpy as jnp
from jax.experimental import pallas as pl
from jax.experimental.pallas import tpu as pltpu


def _round_up(x, m):
    return ((x + m - 1) // m) * m


def _sublane_multiple(dtype):
    # Minimum second-to-last tile dim: 8 (4-byte), 16 (2-byte), 32 (1-byte).
    return max(8, 32 // jnp.dtype(dtype).itemsize)


def _linear_relu_kernel(x_ref, w_ref, b_ref, o_ref, *, precision):
    # x_ref: (TM, K)   w_ref: (K, N)   b_ref: (1, N) f32   o_ref: (TM, N)
    acc = jnp.dot(x_ref[...], w_ref[...],
                  preferred_element_type=jnp.float32, precision=precision)
    acc = acc + b_ref[...]                       # bias broadcast over rows (f32)
    o_ref[...] = jnp.maximum(acc, 0.0).astype(o_ref.dtype)


def make_img_projector_params(weight, bias, *, compute_dtype=jnp.bfloat16):
    """One-time parameter prep (do this at module-setup time, NOT per call).

    Args:
      weight: [d_model, c_in]  -- PyTorch nn.Linear layout.
      bias:   [d_model]
      compute_dtype: dtype fed to the MXU (bf16 recommended in production;
        use jnp.float32 for exact parity with an f32 PyTorch Linear).
    Returns:
      dict of pre-transposed / pre-cast / pre-packed parameters.
    """
    d_model, c_in = weight.shape
    compute_dtype = jnp.dtype(compute_dtype)
    w_t = jnp.asarray(weight, dtype=jnp.float32).T.astype(compute_dtype)  # (c_in, d_model)
    b_row = jnp.asarray(bias, dtype=jnp.float32).reshape(1, d_model)
    params = dict(c_in=int(c_in), d_model=int(d_model), dtype=compute_dtype,
                  w_t=w_t, b=b_row, pack=1, w_t_packed=None, b_packed=None)
    # Lane-packing for narrow inputs (c_in = 64 -> pack 2 rows per 128 lanes)
    # via a block-diagonal weight.  Weight grows to (pack*c_in, pack*d_model)
    # (64 KB for the 64-dim config) -- negligible vs the x HBM stream.
    if c_in < 128 and 128 % c_in == 0:
        pack = 128 // c_in
        wbd = jnp.zeros((pack * c_in, pack * d_model), dtype=compute_dtype)
        for p in range(pack):
            wbd = wbd.at[p * c_in:(p + 1) * c_in,
                         p * d_model:(p + 1) * d_model].set(w_t)
        params.update(pack=pack, w_t_packed=wbd,
                      b_packed=jnp.tile(b_row, (1, pack)))
    return params


def img_projector_forward(x, params, *, tm=None, x_buffers=3, precision=None):
    """Fused Linear + ReLU:  relu(x @ W.T + b).

    Args:
      x:      [..., c_in]  (any leading dims; flattened into a row axis).
              Ideally already in params['dtype']; otherwise cast once here.
      params: output of make_img_projector_params.
      tm:     row tile override (None -> dtype-aware default 2048/4096).
      x_buffers: pipeline depth for the x stream (used only when the grid is
              long enough; default double-buffering otherwise).
      precision: forwarded to jnp.dot (e.g. jax.lax.Precision.HIGHEST for
              f32 parity with PyTorch; memory-bound, so effectively free).
    Returns:
      [..., d_model] in x.dtype (f32 accumulation inside the kernel).
    """
    *lead, c_in = x.shape
    assert c_in == params["c_in"], (c_in, params["c_in"])
    d_model = params["d_model"]
    compute_dtype = params["dtype"]
    out_dtype = x.dtype

    n_rows = math.prod(lead) if lead else 1
    n_rows = max(n_rows, 1)

    if x.dtype != compute_dtype:
        # Fallback (extra HBM pass over x).  Prefer feeding x already in the
        # compute dtype -- the kernel is bound by the x HBM stream.
        x = x.astype(compute_dtype)

    pack = params["pack"]
    use_packed = pack > 1 and (n_rows % pack == 0)
    if use_packed:
        rows_eff = n_rows // pack
        c_eff = pack * c_in
        n_eff = pack * d_model
        w, b = params["w_t_packed"], params["b_packed"]
    else:
        rows_eff, c_eff, n_eff = n_rows, c_in, d_model
        w, b = params["w_t"], params["b"]

    x2 = x.reshape(rows_eff, c_eff)              # contiguous view, no copy

    in_it = jnp.dtype(compute_dtype).itemsize
    out_it = jnp.dtype(out_dtype).itemsize
    sub = _sublane_multiple(compute_dtype)

    # Dtype-aware default tile (bf16 can go larger for the same VMEM), rounded
    # to the dtype sublane multiple, capped so the grid keeps >= ~8 steps
    # (double-buffer overlap + v7x dual-TensorCore sharding).
    if tm is None:
        tm = 4096 if in_it <= 2 else 2048
    tm = _round_up(max(int(tm), sub), sub)
    cap = _round_up(pl.cdiv(rows_eff, 8), sub)
    tm = max(sub, min(tm, cap))

    num_steps = pl.cdiv(rows_eff, tm)            # remainder-safe (ragged last tile)
    grid = (num_steps,)

    # Deeper pipelining on the dominant x stream only when it can help.
    x_bufs = x_buffers if (x_buffers and x_buffers > 2
                           and num_steps >= x_buffers) else 2
    if x_bufs > 2:
        x_spec = pl.BlockSpec((tm, c_eff), lambda i: (i, 0),
                              pipeline_mode=pl.Buffered(x_bufs))
    else:
        x_spec = pl.BlockSpec((tm, c_eff), lambda i: (i, 0))

    # Explicit VMEM budget derived from the real tile footprint (+50% and a
    # couple MiB of headroom); always <= 32 MiB so it is valid on v5e/v6e/v7x.
    vmem_bytes = (tm * c_eff * in_it * x_bufs        # x tiles
                  + c_eff * n_eff * in_it * 2        # weight (const block, 2 bufs)
                  + n_eff * 4 * 2                    # bias
                  + tm * n_eff * out_it * 2)         # output tiles
    vmem_limit = min(max(int(vmem_bytes * 1.5) + (2 << 20), 8 << 20), 32 << 20)

    cost = pl.CostEstimate(
        flops=2 * rows_eff * c_eff * n_eff,
        transcendentals=0,
        bytes_accessed=(rows_eff * c_eff * in_it     # x
                        + c_eff * n_eff * in_it      # weight
                        + n_eff * 4                  # bias (f32)
                        + rows_eff * n_eff * out_it))  # out

    kernel = functools.partial(_linear_relu_kernel, precision=precision)

    out = pl.pallas_call(
        kernel,
        out_shape=jax.ShapeDtypeStruct((rows_eff, n_eff), out_dtype),
        grid_spec=pltpu.PrefetchScalarGridSpec(
            num_scalar_prefetch=0,
            grid=grid,
            in_specs=[
                x_spec,
                pl.BlockSpec((c_eff, n_eff), lambda i: (0, 0)),   # weight: const
                pl.BlockSpec((1, n_eff), lambda i: (0, 0)),       # bias:   const
            ],
            out_specs=pl.BlockSpec((tm, n_eff), lambda i: (i, 0)),
        ),
        compiler_params=pltpu.CompilerParams(
            dimension_semantics=("parallel",),       # row grid shards across TCs (v7x)
            vmem_limit_bytes=vmem_limit),
        cost_estimate=cost,
    )(x2, w, b)

    return out.reshape(*lead, d_model)


if __name__ == "__main__":
    D_MODEL = 128

    key = jax.random.PRNGKey(0)
    kw64, kb64, kw512, kb512, kx1, kx2, kx3, kx4 = jax.random.split(key, 8)

    def ref_forward(xx, weight, bias, compute_dtype):
        w32 = weight.astype(compute_dtype).astype(jnp.float32)
        x32 = xx.astype(compute_dtype).astype(jnp.float32)
        y = jnp.einsum("...k,dk->...d", x32, w32) + bias.astype(jnp.float32)
        return jnp.maximum(y, 0.0)

    # ---- Config A: type != 'full' -> inp_dim = 64 ---------------------------
    w64 = jax.random.uniform(kw64, (D_MODEL, 64), jnp.float32, minval=-0.1, maxval=0.1)
    b64 = jax.random.uniform(kb64, (D_MODEL,), jnp.float32, minval=-0.1, maxval=0.1)
    p64_f32 = make_img_projector_params(w64, b64, compute_dtype=jnp.float32)
    p64_bf16 = make_img_projector_params(w64, b64, compute_dtype=jnp.bfloat16)

    # Test 1: f32, even row count -> lane-packed path (2 rows / 128 lanes).
    x1 = jax.random.normal(kx1, (2, 8, 64), jnp.float32)
    o1 = jax.block_until_ready(img_projector_forward(x1, p64_f32))
    assert o1.shape == (2, 8, D_MODEL) and o1.dtype == jnp.float32
    assert jnp.allclose(o1, ref_forward(x1, w64, b64, jnp.float32), atol=1e-5, rtol=1e-5)

    # Test 2: ragged odd row count (15) -> unpacked fallback, partial last tile.
    x2 = jax.random.normal(kx2, (3, 5, 64), jnp.float32)
    o2 = jax.block_until_ready(img_projector_forward(x2, p64_f32))
    assert o2.shape == (3, 5, D_MODEL)
    assert jnp.allclose(o2, ref_forward(x2, w64, b64, jnp.float32), atol=1e-5, rtol=1e-5)

    # Test 3: bf16 I/O + bf16 weights (production default), packed path,
    #         bf16 sublane rounding (tile rows = 16).
    x3 = x1.astype(jnp.bfloat16)
    o3 = jax.block_until_ready(img_projector_forward(x3, p64_bf16))
    assert o3.shape == (2, 8, D_MODEL) and o3.dtype == jnp.bfloat16
    assert jnp.allclose(o3.astype(jnp.float32),
                        ref_forward(x3, w64, b64, jnp.bfloat16), atol=2e-2, rtol=2e-2)

    # ---- Config B: type == 'full' -> inp_dim = 512 ---------------------------
    w512 = jax.random.uniform(kw512, (D_MODEL, 512), jnp.float32, minval=-0.05, maxval=0.05)
    b512 = jax.random.uniform(kb512, (D_MODEL,), jnp.float32, minval=-0.1, maxval=0.1)
    p512_f32 = make_img_projector_params(w512, b512, compute_dtype=jnp.float32)

    x4 = jax.random.normal(kx4, (2, 4, 512), jnp.float32)
    o4 = jax.block_until_ready(img_projector_forward(x4, p512_f32))
    assert o4.shape == (2, 4, D_MODEL) and o4.dtype == jnp.float32
    assert jnp.allclose(o4, ref_forward(x4, w512, b512, jnp.float32), atol=1e-4, rtol=1e-4)

    print("KERNEL_OK")
</pallas_src>

<mosaic_0001>
module attributes {stable_mosaic.version = 11 : i64} {
  func.func @_linear_relu_kernel(%arg0: i32, %arg1: memref<8x128xf32, #tpu.memory_space<vmem>>, %arg2: memref<128x256xf32, #tpu.memory_space<vmem>>, %arg3: memref<1x256xf32, #tpu.memory_space<vmem>>, %arg4: memref<8x256xf32, #tpu.memory_space<vmem>>) attributes {dimension_semantics = [#tpu.dimension_semantics<parallel>], iteration_bounds = array<i64: 1>, scalar_prefetch = 0 : i64, scratch_operands = 0 : i64, tpu.core_type = #tpu.core_type<tc>, window_params = [{transform_indices = @transform_0, window_bounds = array<i64: 8, 128>}, {pipeline_mode = #tpu.pipeline_mode<synchronous>, transform_indices = @transform_1, window_bounds = array<i64: 128, 256>}, {pipeline_mode = #tpu.pipeline_mode<synchronous>, transform_indices = @transform_2, window_bounds = array<i64: 1, 256>}, {transform_indices = @transform_3, window_bounds = array<i64: 8, 256>}]} {
    %c0 = arith.constant 0 : index
    %c0_0 = arith.constant 0 : index
    %0 = vector.load %arg1[%c0, %c0_0] : memref<8x128xf32, #tpu.memory_space<vmem>>, vector<8x128xf32>
    %c0_1 = arith.constant 0 : index
    %c0_2 = arith.constant 0 : index
    %1 = vector.load %arg2[%c0_1, %c0_2] : memref<128x256xf32, #tpu.memory_space<vmem>>, vector<128x256xf32>
    %cst = arith.constant dense<0.000000e+00> : vector<8x256xf32>
    %2 = tpu.matmul %0, %1, %cst {dimension_numbers = #tpu.dot_dimension_numbers<[1], [0], [0], [1], [0, 0, 1, 1], [], []>} : vector<8x128xf32>, vector<128x256xf32>, vector<8x256xf32> -> vector<8x256xf32>
    %c0_3 = arith.constant 0 : index
    %c0_4 = arith.constant 0 : index
    %3 = vector.load %arg3[%c0_3, %c0_4] : memref<1x256xf32, #tpu.memory_space<vmem>>, vector<1x256xf32>
    %4 = vector.broadcast %3 : vector<1x256xf32> to vector<8x256xf32>
    %5 = arith.addf %2, %4 : vector<8x256xf32>
    %cst_5 = arith.constant 0.000000e+00 : f32
    %6 = vector.broadcast %cst_5 : f32 to vector<8x256xf32>
    %7 = arith.maximumf %5, %6 : vector<8x256xf32>
    %c0_6 = arith.constant 0 : index
    %c0_7 = arith.constant 0 : index
    %8 = vector.load %arg4[%c0_6, %c0_7] : memref<8x256xf32, #tpu.memory_space<vmem>>, vector<8x256xf32>
    tpu.vector_store %arg4[%c0_6, %c0_7], %7 {strides = array<i32>} : memref<8x256xf32, #tpu.memory_space<vmem>>, vector<8x256xf32>,
    return
  }
  func.func @transform_0(%arg0: i32) -> (i32, i32) {
    %c0_i32 = arith.constant 0 : i32
    %c0_i32_0 = arith.constant 0 : i32
    return %arg0, %c0_i32 : i32, i32
  }
  func.func @transform_1(%arg0: i32) -> (i32, i32) {
    %c0_i32 = arith.constant 0 : i32
    %c0_i32_0 = arith.constant 0 : i32
    %c0_i32_1 = arith.constant 0 : i32
    return %c0_i32, %c0_i32_0 : i32, i32
  }
  func.func @transform_2(%arg0: i32) -> (i32, i32) {
    %c0_i32 = arith.constant 0 : i32
    %c0_i32_0 = arith.constant 0 : i32
    %c0_i32_1 = arith.constant 0 : i32
    return %c0_i32, %c0_i32_0 : i32, i32
  }
  func.func @transform_3(%arg0: i32) -> (i32, i32) {
    %c0_i32 = arith.constant 0 : i32
    %c0_i32_0 = arith.constant 0 : i32
    return %arg0, %c0_i32 : i32, i32
  }
}

</mosaic_0001>

<llo_original>
// kernel: tpu_custom_call.1
$region0: #{tpu_custom_call.1}
  #allocation0 [shape = 'u32[]', space=smem, size = 0x4, offset = 0x4, fixed_abs, tag = 'smem constant byte address 0x4 - core index']
  #allocation1 [shape = 'u32[72,128]{1,0:T(1,128)}', space=vmem, size = 0x9000, scoped, tag = 'internal scratch']
  %s0 = inlined_call_operand.hbm [shape: f32[8,128], index: 0, kind: input, shape index: {}]
  %s1 = inlined_call_operand.hbm [shape: f32[128,256], index: 1, kind: input, shape index: {}]
  %s2 = inlined_call_operand.hbm [shape: f32[1,256], index: 2, kind: input, shape index: {}]
  %s3 = inlined_call_operand.hbm [shape: f32[8,256], index: 3, kind: output, shape index: {}]
  %s4 = sld [smem:[#allocation0]]
  $region34: #{tpu_custom_call.1} parent=0
    _
  %s6 = ssub.s32 1, %s4
  %s7 = scalar_select 0, %s6, %s4
  $region1: #{tpu_custom_call.1} parent=0
    #allocation2 [shape = 'u8[4096]{0}', space=vmem, size = 0x1000, scoped, tag = 'input window, operand 0, single buffered']
    #allocation3 [shape = 's32[1]{0}', space=sflag, size = 0x4, scoped, tag = 'scoped memory for tpu_custom_call.1']
    #allocation4 [shape = 's32[1]{0}', space=sflag, size = 0x4, scoped, tag = 'scoped memory for tpu_custom_call.1']
    #allocation5 [shape = 'u8[131072]{0}', space=vmem, size = 0x20000, scoped, tag = 'input window, operand 1, single buffered']
    #allocation6 [shape = 's32[1]{0}', space=sflag, size = 0x4, scoped, tag = 'scoped memory for tpu_custom_call.1']
    #allocation7 [shape = 'u8[1024]{0}', space=vmem, size = 0x400, scoped, tag = 'input window, operand 2, single buffered']
    #allocation8 [shape = 'u8[8192]{0}', space=vmem, size = 0x2000, scoped, tag = 'output window, operand 0, single buffered']
    %8 = vsyncpa [#allocation3], 0
    %9 = vsyncpa [#allocation6], 0
    %10 = vsyncpa [#allocation4], 0
    // Predicated region
    $region2: #{tpu_custom_call.1} parent=1 // pred_check
      _
    $region3: #{tpu_custom_call.1} parent=1 // pred_check_branch
      %12 = sbr.rel (0) target = $region5
    $region4: #{tpu_custom_call.1} parent=1 // pred_region
      %14 = vsyncadd [#allocation3], 0
      %s16 = sshll.u32 %s0, 4
      %s17 = int_to_ptr.hbm [resolvable:$true] %s16
      %s18 = sshll.u32 [#allocation2], 4
      %s19 = int_to_ptr.vmem [resolvable:$true] %s18
      %21 = dma.hbm_to_vmem [thread:$0]  %s17, 128, %s19, [#allocation3]
    $region5: #{tpu_custom_call.1} parent=1 // pred_fallthru
      _
    // Predicated region
    $region6: #{tpu_custom_call.1} parent=1 // pred_check
      _
    $region7: #{tpu_custom_call.1} parent=1 // pred_check_branch
      %23 = sbr.rel (0) target = $region9
    $region8: #{tpu_custom_call.1} parent=1 // pred_region
      %25 = vsyncadd [#allocation6], 0
      %s26 = sshll.u32 %s1, 4
      %s27 = int_to_ptr.hbm [resolvable:$true] %s26
      %s28 = sshll.u32 [#allocation5], 4
      %s29 = int_to_ptr.vmem [resolvable:$true] %s28
      %34 = dma.hbm_to_vmem [thread:$0]  %s27, 4096, %s29, [#allocation6], 256, 256, 16
    $region9: #{tpu_custom_call.1} parent=1 // pred_fallthru
      _
    // Predicated region
    $region10: #{tpu_custom_call.1} parent=1 // pred_check
      _
    $region11: #{tpu_custom_call.1} parent=1 // pred_check_branch
      %36 = sbr.rel (0) target = $region13
    $region12: #{tpu_custom_call.1} parent=1 // pred_region
      %38 = vsyncadd [#allocation6], 0
      %s40 = sshll.u32 %s2, 4
      %s41 = int_to_ptr.hbm [resolvable:$true] %s40
      %s42 = sshll.u32 [#allocation7], 4
      %s43 = int_to_ptr.vmem [resolvable:$true] %s42
      %45 = dma.hbm_to_vmem [thread:$0]  %s41, 32, %s43, [#allocation6]
    $region13: #{tpu_custom_call.1} parent=1 // pred_fallthru
      _
    // Predicated region
    $region14: #{tpu_custom_call.1} parent=1 // pred_check
      _
    $region15: #{tpu_custom_call.1} parent=1 // pred_check_branch
      %47 = sbr.rel (0) target = $region17
    $region16: #{tpu_custom_call.1} parent=1 // pred_region
      %49 = dma.done [#allocation3], 128
    $region17: #{tpu_custom_call.1} parent=1 // pred_fallthru
      _
    // Predicated region
    $region18: #{tpu_custom_call.1} parent=1 // pred_check
      _
    $region19: #{tpu_custom_call.1} parent=1 // pred_check_branch
      %51 = sbr.rel (0) target = $region21
    $region20: #{tpu_custom_call.1} parent=1 // pred_region
      %53 = dma.done [#allocation6], 4096
    $region21: #{tpu_custom_call.1} parent=1 // pred_fallthru
      _
    // Predicated region
    $region22: #{tpu_custom_call.1} parent=1 // pred_check
      _
    $region23: #{tpu_custom_call.1} parent=1 // pred_check_branch
      %55 = sbr.rel (0) target = $region25
    $region24: #{tpu_custom_call.1} parent=1 // pred_region
      %57 = dma.done [#allocation6], 32
    $region25: #{tpu_custom_call.1} parent=1 // pred_fallthru
      _
    %v58 = vld [vmem:[#allocation2] sm:$0xff]
    %v59 = vld [vmem:[#allocation5] sm:$0xff]
    %v60 = vld [vmem:[#allocation5 + $0x8] sm:$0xff]
    %v61 = vld [vmem:[#allocation5 + $0x10] sm:$0xff]
    %v62 = vld [vmem:[#allocation5 + $0x18] sm:$0xff]
    %v63 = vld [vmem:[#allocation5 + $0x20] sm:$0xff]
    %v64 = vld [vmem:[#allocation5 + $0x28] sm:$0xff]
    %v65 = vld [vmem:[#allocation5 + $0x30] sm:$0xff]
    %v66 = vld [vmem:[#allocation5 + $0x38] sm:$0xff]
    %v67 = vld [vmem:[#allocation5 + $0x40] sm:$0xff]
    %v68 = vld [vmem:[#allocation5 + $0x48] sm:$0xff]
    %v69 = vld [vmem:[#allocation5 + $0x50] sm:$0xff]
    %v70 = vld [vmem:[#allocation5 + $0x58] sm:$0xff]
    %v71 = vld [vmem:[#allocation5 + $0x60] sm:$0xff]
    %v72 = vld [vmem:[#allocation5 + $0x68] sm:$0xff]
    %v73 = vld [vmem:[#allocation5 + $0x70] sm:$0xff]
    %v74 = vld [vmem:[#allocation5 + $0x78] sm:$0xff]
    %v75 = vld [vmem:[#allocation5 + $0x80] sm:$0xff]
    %v76 = vld [vmem:[#allocation5 + $0x88] sm:$0xff]
    %v77 = vld [vmem:[#allocation5 + $0x90] sm:$0xff]
    %v78 = vld [vmem:[#allocation5 + $0x98] sm:$0xff]
    %v79 = vld [vmem:[#allocation5 + $0xa0] sm:$0xff]
    %v80 = vld [vmem:[#allocation5 + $0xa8] sm:$0xff]
    %v81 = vld [vmem:[#allocation5 + $0xb0] sm:$0xff]
    %v82 = vld [vmem:[#allocation5 + $0xb8] sm:$0xff]
    %v83 = vld [vmem:[#allocation5 + $0xc0] sm:$0xff]
    %v84 = vld [vmem:[#allocation5 + $0xc8] sm:$0xff]
    %v85 = vld [vmem:[#allocation5 + $0xd0] sm:$0xff]
    %v86 = vld [vmem:[#allocation5 + $0xd8] sm:$0xff]
    %v87 = vld [vmem:[#allocation5 + $0xe0] sm:$0xff]
    %v88 = vld [vmem:[#allocation5 + $0xe8] sm:$0xff]
    %v89 = vld [vmem:[#allocation5 + $0xf0] sm:$0xff]
    %v90 = vld [vmem:[#allocation5 + $0xf8] sm:$0xff]
    %v91 = vld [vmem:[#allocation7] sm:$0x3]
    %v93 = vperm.slane %v91, 0
    %v94 = vperm.slane %v91, 1
    %97 = vmatpush.msra.mxu0 %v89
    %98 = vmatpush.msra.mxu0 %v87
    %99 = vmatpush.msra.mxu0 %v85
    %100 = vmatpush.msra.mxu0 %v83
    %101 = vmatpush.msra.mxu0 %v81
    %102 = vmatpush.msra.mxu0 %v79
    %103 = vmatpush.msra.mxu0 %v77
    %104 = vmatpush.msra.mxu0 %v75
    %105 = vmatpush.msra.mxu0 %v73
    %106 = vmatpush.msra.mxu0 %v71
    %107 = vmatpush.msra.mxu0 %v69
    %108 = vmatpush.msra.mxu0 %v67
    %109 = vmatpush.msra.mxu0 %v65
    %110 = vmatpush.msra.mxu0 %v63
    %111 = vmatpush.msra.mxu0 %v61
    %112 = vmatpush.msra.mxu0 %v59
    %113 = vmatmul.f32.gmra.mxu0 %v58
    %v114 = vpop.f32.mrf.mxu0
    %v115 = vadd.f32 %v93, %v114
    %116 = vdwg.mxu0
    %117 = vmatpush.msra.mxu0 %v90
    %118 = vmatpush.msra.mxu0 %v88
    %119 = vmatpush.msra.mxu0 %v86
    %120 = vmatpush.msra.mxu0 %v84
    %121 = vmatpush.msra.mxu0 %v82
    %122 = vmatpush.msra.mxu0 %v80
    %123 = vmatpush.msra.mxu0 %v78
    %124 = vmatpush.msra.mxu0 %v76
    %125 = vmatpush.msra.mxu0 %v74
    %126 = vmatpush.msra.mxu0 %v72
    %127 = vmatpush.msra.mxu0 %v70
    %128 = vmatpush.msra.mxu0 %v68
    %129 = vmatpush.msra.mxu0 %v66
    %130 = vmatpush.msra.mxu0 %v64
    %131 = vmatpush.msra.mxu0 %v62
    %132 = vmatpush.msra.mxu0 %v60
    %133 = vmatmul.f32.gmra.mxu0 %v58
    %v134 = vpop.f32.mrf.mxu0
    %v135 = vadd.f32 %v94, %v134
    %136 = vdwg.mxu0
    %v137 = vmax.f32 %v115, 0.0
    %v138 = vmax.f32 %v135, 0.0
    %139 = vst [vmem:[#allocation8] sm:$0xff] %v137
    %140 = vst [vmem:[#allocation8 + $0x8] sm:$0xff] %v138
    // Predicated region
    $region26: #{tpu_custom_call.1} parent=1 // pred_check
      _
    $region27: #{tpu_custom_call.1} parent=1 // pred_check_branch
      %142 = sbr.rel (0) target = $region29
    $region28: #{tpu_custom_call.1} parent=1 // pred_region
      %144 = vsyncadd [#allocation4], 0
      %s146 = sshll.u32 [#allocation8], 4
      %s147 = int_to_ptr.vmem [resolvable:$true] %s146
      %s148 = sshll.u32 %s3, 4
      %s149 = int_to_ptr.hbm [resolvable:$true] %s148
      %151 = dma.vmem_to_hbm [thread:$0]  %s147, 256, %s149, [#allocation4]
    $region29: #{tpu_custom_call.1} parent=1 // pred_fallthru
      _
    // Predicated region
    $region30: #{tpu_custom_call.1} parent=1 // pred_check
      _
    $region31: #{tpu_custom_call.1} parent=1 // pred_check_branch
      %153 = sbr.rel (0) target = $region33
    $region32: #{tpu_custom_call.1} parent=1 // pred_region
      %155 = dma.done [#allocation4], 256
    $region33: #{tpu_custom_call.1} parent=1 // pred_fallthru
      _
    %156 = vsyncpa [#allocation3], 1
    %157 = vsyncpa [#allocation6], 1
    %158 = vsyncpa [#allocation4], 1

</llo_original>
